<compile_context>
chip_gen: v7x
topology: tpu7x:2x2x1
jax: 0.10.0
libtpu: 0.0.40
codegen_flags: <defaults>
</compile_context>

<pallas_src>
import functools
import math

import jax
import jax.numpy as jnp
from jax import lax
from jax.experimental import pallas as pl
from jax.experimental.pallas import tpu as pltpu


def _round_up(x: int, m: int) -> int:
    return (x + m - 1) // m * m


def _embed_gather_kernel(ids_ref, table_hbm, out_ref, buf, sem, *, scale: float):
    """Gather one block of T embedding rows from HBM and scale them.

    ids_ref:   (N_pad,) int32 token ids, scalar-prefetched into SMEM.
    table_hbm: (V, D)   embedding table, left in HBM (memory_space=pl.ANY).
    out_ref:   (T, D)   output block = table[ids_block] * scale.
    buf:       (2, T, D) VMEM scratch (double-buffered gather target).
    sem:       (2,)     DMA semaphores, one per buffer slot.
    """
    i = pl.program_id(0)
    nb = pl.num_programs(0)
    T = out_ref.shape[0]

    def start_fetch(block, slot):
        base = block * T

        def body(t, carry):
            row = ids_ref[base + t]
            pltpu.make_async_copy(
                table_hbm.at[pl.ds(row, 1)],      # (1, D) row in HBM
                buf.at[slot, pl.ds(t, 1)],        # (1, D) row in VMEM scratch
                sem.at[slot],
            ).start()
            return carry

        lax.fori_loop(0, T, body, 0, unroll=False)

    # Prime the pipeline: fetch block 0 into slot 0 on the first step.
    @pl.when(i == 0)
    def _():
        start_fetch(0, 0)

    slot = i % 2

    # Prefetch the next block's rows into the other slot while this block is
    # waited on / processed (requires sequential grid -> "arbitrary" axis).
    @pl.when(i + 1 < nb)
    def _():
        start_fetch(i + 1, 1 - slot)

    # Wait for this block's T row DMAs.  One matching-size wait per issued copy
    # (the production paged-attention pattern: many copies, one semaphore).
    def wait_body(t, carry):
        pltpu.make_async_copy(
            table_hbm.at[pl.ds(0, 1)],            # src identity irrelevant for wait
            buf.at[slot, pl.ds(t, 1)],
            sem.at[slot],
        ).wait()
        return carry

    lax.fori_loop(0, T, wait_body, 0, unroll=False)

    # Fused scale + cast straight from the gathered rows (no f32 intermediate;
    # the VPU multiply hides under the memory-bound roofline).
    out_ref[...] = (buf[slot] * scale).astype(out_ref.dtype)


def input_embeddings_forward(token_ids, emb_table, *, max_block_tokens: int = 256):
    """Pallas equivalent of InputEmbeddings.forward.

    token_ids: (B, S) integer indices in [0, vocab)
    emb_table: (vocab, d_model) float table
    returns:   (B, S, d_model) = emb_table[token_ids] * sqrt(d_model)
    """
    B, S = token_ids.shape
    V, D = emb_table.shape
    N = B * S
    scale = float(math.sqrt(D))
    itemsize = jnp.dtype(emb_table.dtype).itemsize

    # VMEM plan: 2x(T,D) pipelined output block + (2,T,D) gather scratch
    # = 4*T*D*itemsize.  Keep it well under v5e's 16 MiB default scoped limit
    # (the table itself never enters VMEM).
    budget_bytes = 8 * 1024 * 1024
    t_cap = max(8, (budget_bytes // (4 * D * itemsize)) // 8 * 8)
    T = min(max(8, (max_block_tokens // 8) * 8), t_cap)
    if N <= T:
        T = _round_up(N, 8)        # single block, minimal row padding
    N_pad = _round_up(N, T)
    num_blocks = N_pad // T

    # Clamp ids so a bad token can never drive an out-of-range HBM DMA; padded
    # tail rows gather row 0 and are sliced off below.
    ids = jnp.clip(token_ids.reshape(N).astype(jnp.int32), 0, V - 1)
    if N_pad != N:
        ids = jnp.pad(ids, (0, N_pad - N))

    out_flat = pl.pallas_call(
        functools.partial(_embed_gather_kernel, scale=scale),
        out_shape=jax.ShapeDtypeStruct((N_pad, D), emb_table.dtype),
        grid_spec=pltpu.PrefetchScalarGridSpec(
            num_scalar_prefetch=1,                         # ids -> SMEM
            grid=(num_blocks,),
            in_specs=[pl.BlockSpec(memory_space=pl.ANY)],  # table stays in HBM
            out_specs=pl.BlockSpec((T, D), lambda i, ids: (i, 0)),
            scratch_shapes=[
                pltpu.VMEM((2, T, D), emb_table.dtype),    # double-buffered gather target
                pltpu.SemaphoreType.DMA((2,)),             # one DMA sem per slot
            ],
        ),
        compiler_params=pltpu.CompilerParams(
            # Cross-step prefetch (block i+1 fetched during step i) needs
            # sequential grid execution; the kernel is HBM-bound anyway.
            dimension_semantics=("arbitrary",),
        ),
    )(ids, emb_table)

    return out_flat[:N].reshape(B, S, D)


if __name__ == "__main__":
    # Small, deterministic shapes consistent with the module's forward.
    batch, seq = 2, 8
    vocab_size, d_model = 64, 128

    key = jax.random.PRNGKey(0)
    k_tab, k_ids = jax.random.split(key)

    emb_table = jax.random.normal(k_tab, (vocab_size, d_model), dtype=jnp.float32)
    token_ids = jax.random.randint(k_ids, (batch, seq), 0, vocab_size, dtype=jnp.int32)

    # Pure-JAX reference.
    ref = jnp.take(emb_table, token_ids, axis=0) * math.sqrt(d_model)

    # Single-block path (all 16 tokens in one grid step).
    out = jax.block_until_ready(input_embeddings_forward(token_ids, emb_table))
    assert out.shape == (batch, seq, d_model)
    assert jnp.allclose(out, ref, atol=1e-5, rtol=1e-5), "single-block mismatch vs reference"

    # Multi-block path (T=8 -> 2 grid steps) to exercise the cross-step
    # double-buffered DMA prefetch.
    out2 = jax.block_until_ready(
        input_embeddings_forward(token_ids, emb_table, max_block_tokens=8))
    assert jnp.allclose(out2, ref, atol=1e-5, rtol=1e-5), "multi-block mismatch vs reference"

    print("KERNEL_OK")
</pallas_src>

<mosaic_0001>
module attributes {stable_mosaic.version = 11 : i64} {
  func.func @_embed_gather_kernel(%arg0: i32, %arg1: memref<16xi32, #tpu.memory_space<smem>>, %arg2: memref<64x128xf32, #tpu.memory_space<any>>, %arg3: memref<16x128xf32, #tpu.memory_space<vmem>>, %arg4: memref<2x16x128xf32, #tpu.memory_space<vmem>>, %arg5: memref<2x!tpu.dma_semaphore, #tpu.memory_space<semaphore_mem>>) attributes {dimension_semantics = [#tpu.dimension_semantics<arbitrary>], iteration_bounds = array<i64: 1>, scalar_prefetch = 1 : i64, scratch_operands = 2 : i64, tpu.core_type = #tpu.core_type<tc>, window_params = [{}, {transform_indices = @transform_1, window_bounds = array<i64: 16, 128>}]} {
    %c0_i32 = arith.constant 0 : i32
    %0 = arith.cmpi eq, %arg0, %c0_i32 : i32
    %1 = arith.extui %0 : i1 to i32
    %c0_i32_0 = arith.constant 0 : i32
    %2 = arith.cmpi ne, %1, %c0_i32_0 : i32
    scf.if %2 {
      %c0_i32_14 = arith.constant 0 : i32
      %c16_i32_15 = arith.constant 16 : i32
      %24 = arith.addi %c0_i32_14, %c16_i32_15 : i32
      %c1_i32_16 = arith.constant 1 : i32
      scf.for %arg6 = %c0_i32_14 to %24 step %c1_i32_16  : i32 {
        %c0_i32_18 = arith.constant 0 : i32
        %25 = arith.addi %c0_i32_18, %arg6 : i32
        %26 = arith.index_cast %25 : i32 to index
        %27 = memref.load %arg1[%26] : memref<16xi32, #tpu.memory_space<smem>>
        %c0_i32_19 = arith.constant 0 : i32
        %c0_i32_20 = arith.constant 0 : i32
        %c0_i32_21 = arith.constant 0 : i32
        %28 = tpu.memref_slice %arg2[%27, %c0_i32_21] : memref<64x128xf32, #tpu.memory_space<any>> -> memref<1x128xf32, #tpu.memory_space<any>>
        %c0_i32_22 = arith.constant 0 : i32
        %29 = tpu.memref_slice %arg4[%c0_i32_19, %arg6, %c0_i32_22] : memref<2x16x128xf32, #tpu.memory_space<vmem>> -> memref<1x1x128xf32, #tpu.memory_space<vmem>>
        %30 = tpu.memref_squeeze %29 : memref<1x1x128xf32, #tpu.memory_space<vmem>> -> memref<1x128xf32, #tpu.memory_space<vmem>>
        %31 = tpu.memref_slice %arg5[%c0_i32_20] : memref<2x!tpu.dma_semaphore, #tpu.memory_space<semaphore_mem>> -> memref<1x!tpu.dma_semaphore, #tpu.memory_space<semaphore_mem>>
        %32 = tpu.memref_squeeze %31 : memref<1x!tpu.dma_semaphore, #tpu.memory_space<semaphore_mem>> -> memref<!tpu.dma_semaphore, #tpu.memory_space<semaphore_mem>>
        tpu.enqueue_dma source(%28 : memref<1x128xf32, #tpu.memory_space<any>>) target(%30 : memref<1x128xf32, #tpu.memory_space<vmem>>) target_semaphore(%32 : memref<!tpu.dma_semaphore, #tpu.memory_space<semaphore_mem>>)
      }
      %c16_i32_17 = arith.constant 16 : i32
    } else {
    }
    %c2_i32 = arith.constant 2 : i32
    %c0_i32_1 = arith.constant 0 : i32
    %3 = arith.cmpi eq, %c2_i32, %c0_i32_1 : i32
    %c1_i32 = arith.constant 1 : i32
    %4 = arith.select %3, %c1_i32, %c2_i32 : i32
    %5 = arith.remsi %arg0, %4 : i32
    %c0_i32_2 = arith.constant 0 : i32
    %6 = arith.cmpi ne, %5, %c0_i32_2 : i32
    %c0_i32_3 = arith.constant 0 : i32
    %7 = arith.cmpi slt, %5, %c0_i32_3 : i32
    %c0_i32_4 = arith.constant 0 : i32
    %8 = arith.cmpi slt, %4, %c0_i32_4 : i32
    %9 = arith.xori %7, %8 : i1
    %10 = arith.andi %9, %6 : i1
    %11 = arith.addi %5, %4 : i32
    %12 = arith.select %10, %11, %5 : i32
    %c1_i32_5 = arith.constant 1 : i32
    %13 = arith.addi %arg0, %c1_i32_5 : i32
    %c1_i32_6 = arith.constant 1 : i32
    %14 = arith.cmpi slt, %13, %c1_i32_6 : i32
    %15 = arith.extui %14 : i1 to i32
    %c0_i32_7 = arith.constant 0 : i32
    %16 = arith.cmpi ne, %15, %c0_i32_7 : i32
    scf.if %16 {
      %c1_i32_14 = arith.constant 1 : i32
      %24 = arith.addi %arg0, %c1_i32_14 : i32
      %c1_i32_15 = arith.constant 1 : i32
      %25 = arith.subi %c1_i32_15, %12 : i32
      %c16_i32_16 = arith.constant 16 : i32
      %26 = arith.muli %24, %c16_i32_16 : i32
      %c0_i32_17 = arith.constant 0 : i32
      %c16_i32_18 = arith.constant 16 : i32
      %27 = arith.addi %c0_i32_17, %c16_i32_18 : i32
      %c1_i32_19 = arith.constant 1 : i32
      scf.for %arg6 = %c0_i32_17 to %27 step %c1_i32_19  : i32 {
        %28 = arith.addi %26, %arg6 : i32
        %29 = arith.index_cast %28 : i32 to index
        %30 = memref.load %arg1[%29] : memref<16xi32, #tpu.memory_space<smem>>
        %c0_i32_21 = arith.constant 0 : i32
        %31 = tpu.memref_slice %arg2[%30, %c0_i32_21] : memref<64x128xf32, #tpu.memory_space<any>> -> memref<1x128xf32, #tpu.memory_space<any>>
        %c0_i32_22 = arith.constant 0 : i32
        %32 = tpu.memref_slice %arg4[%25, %arg6, %c0_i32_22] : memref<2x16x128xf32, #tpu.memory_space<vmem>> -> memref<1x1x128xf32, #tpu.memory_space<vmem>>
        %33 = tpu.memref_squeeze %32 : memref<1x1x128xf32, #tpu.memory_space<vmem>> -> memref<1x128xf32, #tpu.memory_space<vmem>>
        %34 = tpu.memref_slice %arg5[%25] : memref<2x!tpu.dma_semaphore, #tpu.memory_space<semaphore_mem>> -> memref<1x!tpu.dma_semaphore, #tpu.memory_space<semaphore_mem>>
        %35 = tpu.memref_squeeze %34 : memref<1x!tpu.dma_semaphore, #tpu.memory_space<semaphore_mem>> -> memref<!tpu.dma_semaphore, #tpu.memory_space<semaphore_mem>>
        tpu.enqueue_dma source(%31 : memref<1x128xf32, #tpu.memory_space<any>>) target(%33 : memref<1x128xf32, #tpu.memory_space<vmem>>) target_semaphore(%35 : memref<!tpu.dma_semaphore, #tpu.memory_space<semaphore_mem>>)
      }
      %c16_i32_20 = arith.constant 16 : i32
    } else {
    }
    %c0_i32_8 = arith.constant 0 : i32
    %c16_i32 = arith.constant 16 : i32
    %17 = arith.addi %c0_i32_8, %c16_i32 : i32
    %c1_i32_9 = arith.constant 1 : i32
    scf.for %arg6 = %c0_i32_8 to %17 step %c1_i32_9  : i32 {
      %c0_i32_14 = arith.constant 0 : i32
      %c0_i32_15 = arith.constant 0 : i32
      %24 = tpu.memref_slice %arg2[%c0_i32_14, %c0_i32_15] : memref<64x128xf32, #tpu.memory_space<any>> -> memref<1x128xf32, #tpu.memory_space<any>>
      %c0_i32_16 = arith.constant 0 : i32
      %25 = tpu.memref_slice %arg4[%12, %arg6, %c0_i32_16] : memref<2x16x128xf32, #tpu.memory_space<vmem>> -> memref<1x1x128xf32, #tpu.memory_space<vmem>>
      %26 = tpu.memref_squeeze %25 : memref<1x1x128xf32, #tpu.memory_space<vmem>> -> memref<1x128xf32, #tpu.memory_space<vmem>>
      %27 = tpu.memref_slice %arg5[%12] : memref<2x!tpu.dma_semaphore, #tpu.memory_space<semaphore_mem>> -> memref<1x!tpu.dma_semaphore, #tpu.memory_space<semaphore_mem>>
      %28 = tpu.memref_squeeze %27 : memref<1x!tpu.dma_semaphore, #tpu.memory_space<semaphore_mem>> -> memref<!tpu.dma_semaphore, #tpu.memory_space<semaphore_mem>>
      tpu.wait_dma2 semaphore(%28 : memref<!tpu.dma_semaphore, #tpu.memory_space<semaphore_mem>>) src(%24 : memref<1x128xf32, #tpu.memory_space<any>>) dst(%26 : memref<1x128xf32, #tpu.memory_space<vmem>>)
    }
    %c16_i32_10 = arith.constant 16 : i32
    %18 = arith.index_cast %12 : i32 to index
    %c0 = arith.constant 0 : index
    %c0_11 = arith.constant 0 : index
    %19 = vector.load %arg4[%18, %c0, %c0_11] : memref<2x16x128xf32, #tpu.memory_space<vmem>>, vector<1x16x128xf32>
    %20 = vector.shape_cast %19 : vector<1x16x128xf32> to vector<16x128xf32>
    %cst = arith.constant 11.3137083 : f32
    %21 = vector.broadcast %cst : f32 to vector<16x128xf32>
    %22 = arith.mulf %20, %21 : vector<16x128xf32>
    %c0_12 = arith.constant 0 : index
    %c0_13 = arith.constant 0 : index
    %23 = vector.load %arg3[%c0_12, %c0_13] : memref<16x128xf32, #tpu.memory_space<vmem>>, vector<16x128xf32>
    tpu.vector_store %arg3[%c0_12, %c0_13], %22 {strides = array<i32>} : memref<16x128xf32, #tpu.memory_space<vmem>>, vector<16x128xf32>,
    return
  }
  func.func @transform_1(%arg0: i32, %arg1: memref<16xi32, #tpu.memory_space<smem>>) -> (i32, i32) {
    %c0_i32 = arith.constant 0 : i32
    %c0_i32_0 = arith.constant 0 : i32
    return %arg0, %c0_i32 : i32, i32
  }
}

</mosaic_0001>

<llo_original>
// kernel: tpu_custom_call.1
$region0: #{tpu_custom_call.1}
  #allocation0 [shape = 'u32[]', space=smem, size = 0x4, offset = 0x4, fixed_abs, tag = 'smem constant byte address 0x4 - core index']
  #allocation1 [shape = 'u32[144,128]{1,0:T(1,128)}', space=vmem, size = 0x12000, scoped, tag = 'internal scratch']
  #allocation2 [shape = 'f32[2,16,128]{2,1,0:T(8,128)}', space=vmem, size = 0x4000, scoped, tag = 'scratch operand']
  #allocation3 [shape = 's32[2]{0}', space=sflag, size = 0x8, scoped, tag = 'scratch operand']
  #allocation4 [shape = 's32[1]{0}', space=sflag, size = 0x4, scoped, tag = 'scoped memory for tpu_custom_call.1']
  #allocation5 [shape = 'u8[512]{0}', space=smem, size = 0x200, scoped, tag = 'prefetched SMEM operand 0']
  #allocation8 [shape = 's32[]', space=sflag, size = 0x4, offset = 0, fixed_abs, tag = 'sflag constant byte address 0x0 - dummy sync flag']
  #allocation9 [shape = 's32[]', space=sflag, size = 0x4, offset = 0, fixed_abs, tag = 'sflag constant byte address 0x0 - dummy sync flag']
  #allocation10 [shape = 'u32[]', space=smem, size = 0x4, offset = 0x44, fixed_abs, tag = 'smem constant byte address 0x44 - assertion arg 0']
  #allocation11 [shape = 'u32[]', space=smem, size = 0x4, offset = 0x48, fixed_abs, tag = 'smem constant byte address 0x48 - assertion arg 1']
  #allocation12 [shape = 's32[]', space=sflag, size = 0x4, offset = 0, fixed_abs, tag = 'sflag constant byte address 0x0 - dummy sync flag']
  #allocation13 [shape = 's32[]', space=sflag, size = 0x4, offset = 0, fixed_abs, tag = 'sflag constant byte address 0x0 - dummy sync flag']
  %s0 = inlined_call_operand.hbm [shape: s32[16], index: 0, kind: input, shape index: {}]
  %s1 = inlined_call_operand.hbm [shape: f32[64,128], index: 1, kind: input, shape index: {}]
  %s2 = inlined_call_operand.hbm [shape: f32[16,128], index: 2, kind: output, shape index: {}]
  %s3 = sld [smem:[#allocation0]]
  $region47: #{tpu_custom_call.1} parent=0
    _
  %s5 = ssub.s32 1, %s3
  %s6 = scalar_select 0, %s5, %s3
  %8 = dma.hbm_to_smem %s0, 16, [#allocation5], [#allocation4]
  %9 = dma.done [#allocation4], 16
  %10 = sfence
  $region1: #{tpu_custom_call.1} parent=0
    #allocation6 [shape = 'u8[8192]{0}', space=vmem, size = 0x2000, scoped, tag = 'output window, operand 0, single buffered']
    #allocation7 [shape = 's32[1]{0}', space=sflag, size = 0x4, scoped, tag = 'scoped memory for tpu_custom_call.1']
    %11 = vsyncpa [#allocation7], 0
    %p12 = scmp.eq.s32.totalorder 0, 0
    // Predicated region
    $region2: #{tpu_custom_call.1} parent=1 // pred_check
      %p13 = pneg %p12
    $region3: #{tpu_custom_call.1} parent=1 // pred_check_branch
      %15 = sbr.rel (%p13) target = $region5
    $region4: #{tpu_custom_call.1} parent=1 // pred_region
      loop: start=0, step=1, limit=16
      $region6: #{tpu_custom_call.1} parent=4 // loop_pre_header
        _
      $region7: #{tpu_custom_call.1} parent=4 // loop_header
        %s17 = sphi 0, %s21
        %p18 = scmp.ge.s32.totalorder %s17, 16
      $region8: #{tpu_custom_call.1} parent=4 // loop_header_branch
        %20 = sbr.rel (%p18) target = $region12
      $region9: #{tpu_custom_call.1} parent=4 // loop_body
        %s22 = sld [smem:[#allocation5 + %s17]]
        %s23 = smul.addr %s22, 16
        %s24 = scalar_lea.hbm %s1, %s23
        %s25 = scalar_lea.vmem [#allocation2], %s17
        // Predicated region
        $region13: #{tpu_custom_call.1} parent=9 // pred_check
          _
        $region14: #{tpu_custom_call.1} parent=9 // pred_check_branch
          %27 = sbr.rel target = $region16
        $region15: #{tpu_custom_call.1} parent=9 // pred_region
          %28 = sst [smem:[#allocation10]] [#allocation9]
          %29 = sst [smem:[#allocation11]] [#allocation8]
        $region16: #{tpu_custom_call.1} parent=9 // pred_fallthru
          _
        %31 = shalt.err (0)
        %s33 = sshll.u32 %s25, 4
        %s34 = int_to_ptr.vmem [resolvable:$true] %s33
        %36 = dma.hbm_to_vmem [thread:$0]  %s24, 16, %s34, [#allocation3]
      $region10: #{tpu_custom_call.1} parent=4 // loop_footer
        %s21 = sadd.s32 1, %s17
      $region11: #{tpu_custom_call.1} parent=4 // loop_footer_branch
        %16 = sbr.rel target = $region7
      $region12: #{tpu_custom_call.1} parent=4 // loop_exit
        _
    $region5: #{tpu_custom_call.1} parent=1 // pred_fallthru
      _
    %s37 = ssub.s32 0, 0
    %s38 = ssub.s32 0, 0
    %p39 = scmp.ne.s32.totalorder 0, 0
    %p40 = scmp.lt.s32.totalorder 0, 0
    %p41 = pnand %p40, %p39
    %p42 = pneg %p41
    %s43 = sadd.s32 0, 2
    %s44 = scalar_select %p42, %s43, 0
    %s45 = sadd.s32 0, 1
    %p46 = scmp.lt.s32.totalorder %s45, 1
    // Predicated region
    $region17: #{tpu_custom_call.1} parent=1 // pred_check
      %p47 = pneg %p46
    $region18: #{tpu_custom_call.1} parent=1 // pred_check_branch
      %49 = sbr.rel (%p47) target = $region20
    $region19: #{tpu_custom_call.1} parent=1 // pred_region
      %s50 = ssub.s32 1, %s44
      %s51 = smul.u32 %s45, 16
      loop: start=0, step=1, limit=16
      $region21: #{tpu_custom_call.1} parent=19 // loop_pre_header
        _
      $region22: #{tpu_custom_call.1} parent=19 // loop_header
        %s53 = sphi 0, %s57
        %p54 = scmp.ge.s32.totalorder %s53, 16
      $region23: #{tpu_custom_call.1} parent=19 // loop_header_branch
        %56 = sbr.rel (%p54) target = $region27
      $region24: #{tpu_custom_call.1} parent=19 // loop_body
        %s58 = sadd.s32 %s51, %s53
        %s59 = sld [smem:[#allocation5 + %s58]]
        %s60 = smul.addr %s59, 16
        %s61 = scalar_lea.hbm %s1, %s60
        %s62 = smul.u32 %s50, 16
        %s63 = sadd.s32 %s53, %s62
        %s64 = scalar_lea.vmem [#allocation2], %s63
        %s65 = scalar_lea.sflag [#allocation3], %s50
        // Predicated region
        $region28: #{tpu_custom_call.1} parent=24 // pred_check
          _
        $region29: #{tpu_custom_call.1} parent=24 // pred_check_branch
          %67 = sbr.rel target = $region31
        $region30: #{tpu_custom_call.1} parent=24 // pred_region
          %68 = sst [smem:[#allocation10]] [#allocation13]
          %69 = sst [smem:[#allocation11]] [#allocation12]
        $region31: #{tpu_custom_call.1} parent=24 // pred_fallthru
          _
        %71 = shalt.err (0)
        %s73 = sshll.u32 %s64, 4
        %s74 = int_to_ptr.vmem [resolvable:$true] %s73
        %76 = dma.hbm_to_vmem [thread:$0]  %s61, 16, %s74, %s65
      $region25: #{tpu_custom_call.1} parent=19 // loop_footer
        %s57 = sadd.s32 1, %s53
      $region26: #{tpu_custom_call.1} parent=19 // loop_footer_branch
        %52 = sbr.rel target = $region22
      $region27: #{tpu_custom_call.1} parent=19 // loop_exit
        _
    $region20: #{tpu_custom_call.1} parent=1 // pred_fallthru
      _
    loop: start=0, step=1, limit=16
    $region32: #{tpu_custom_call.1} parent=1 // loop_pre_header
      _
    $region33: #{tpu_custom_call.1} parent=1 // loop_header
      %s78 = sphi 0, %s82
      %p79 = scmp.ge.s32.totalorder %s78, 16
    $region34: #{tpu_custom_call.1} parent=1 // loop_header_branch
      %81 = sbr.rel (%p79) target = $region38
    $region35: #{tpu_custom_call.1} parent=1 // loop_body
      %s83 = scalar_lea.sflag [#allocation3], %s44
      %s84 = smul.u32 1, 1
      %s85 = sshll.u32 %s84, 4
      %86 = dma.done %s83, %s85
    $region36: #{tpu_custom_call.1} parent=1 // loop_footer
      %s82 = sadd.s32 1, %s78
    $region37: #{tpu_custom_call.1} parent=1 // loop_footer_branch
      %77 = sbr.rel target = $region33
    $region38: #{tpu_custom_call.1} parent=1 // loop_exit
      _
    %s87 = smul.u32 %s44, 16
    %s88 = scalar_lea.vmem [#allocation2], %s87
    %v89 = vld [vmem:[%s88] sm:$0xff]
    %v90 = vld [vmem:[%s88 + $0x8] sm:$0xff]
    %v91 = vmul.f32 %v89, 11.313708
    %v92 = vmul.f32 %v90, 11.313708
    %93 = vst [vmem:[#allocation6] sm:$0xff] %v91
    %94 = vst [vmem:[#allocation6 + $0x8] sm:$0xff] %v92
    // Predicated region
    $region39: #{tpu_custom_call.1} parent=1 // pred_check
      _
    $region40: #{tpu_custom_call.1} parent=1 // pred_check_branch
      %96 = sbr.rel (0) target = $region42
    $region41: #{tpu_custom_call.1} parent=1 // pred_region
      %s98 = ssub.s32 256, 256
      %99 = vsyncadd [#allocation7], %s98
      %s100 = sshll.u32 [#allocation6], 4
      %s101 = int_to_ptr.vmem [resolvable:$true] %s100
      %106 = dma.vmem_to_hbm [thread:$0]  %s101, 256, %s2, [#allocation7], 128, 128, 8
    $region42: #{tpu_custom_call.1} parent=1 // pred_fallthru
      _
    // Predicated region
    $region43: #{tpu_custom_call.1} parent=1 // pred_check
      _
    $region44: #{tpu_custom_call.1} parent=1 // pred_check_branch
      %108 = sbr.rel (0) target = $region46
    $region45: #{tpu_custom_call.1} parent=1 // pred_region
      %109 = dma.done [#allocation7], 256
    $region46: #{tpu_custom_call.1} parent=1 // pred_fallthru
      _
    %110 = vsyncpa [#allocation7], 1
  %111 = vsyncmov [#allocation3]
  %s112 = vpop.sfrf %111
  %p113 = scmp.eq.s32.totalorder %s112, 0
  %p114 = pneg %p113
  %116 = shalt.err (%p114)
  %s117 = scalar_lea.sflag [#allocation3], 1
  %118 = vsyncmov %s117
  %s119 = vpop.sfrf %118
  %p120 = scmp.eq.s32.totalorder %s119, 0
  %p121 = pneg %p120
  %123 = shalt.err (%p121)

</llo_original>
